<compile_context>
chip_gen: v7x
topology: tpu7x:2x2x1
jax: 0.10.0
libtpu: 0.0.40
codegen_flags: <defaults>
</compile_context>

<pallas_src>
import functools

import jax
import jax.numpy as jnp
import numpy as np
from jax import lax
from jax.experimental import pallas as pl
from jax.experimental.pallas import tpu as pltpu


# ------------------------------- helpers --------------------------------------

def _round_up(x, m):
    return (x + m - 1) // m * m


def _pick_tile(dim, preferred, align):
    """Largest tile <= preferred that is a multiple of `align` and divides `dim`
    exactly; the full dim if dim <= preferred; otherwise `preferred` (caller pads)."""
    if dim <= preferred:
        return dim
    start = preferred - (preferred % align)
    for t in range(start, align - 1, -align):
        if dim % t == 0:
            return t
    return preferred


def _pick_head_block(H, hd, max_width=512):
    """Head-block size for the attention grid.  The head axis sits second-to-last
    in the qkv block, so a partial block must be a multiple of 8 sublanes and
    divide H; prefer the largest such block with block_h*hd <= max_width (bounds
    per-step VMEM).  Otherwise process all heads per step."""
    if H % 8 == 0:
        best = None
        cand = 8
        while cand <= H:
            if H % cand == 0 and cand * hd <= max_width:
                best = cand
            cand += 8
        if best is not None:
            return best
    return H


# ----------------------------- Pallas kernels ---------------------------------

def linear_kernel(x_ref, w_ref, b_ref, o_ref, acc_ref):
    """y = x @ W + b, with W already stored (Din, Dout); f32 VMEM accumulator."""
    @pl.when(pl.program_id(2) == 0)
    def _():
        acc_ref[...] = jnp.zeros_like(acc_ref)

    acc_ref[...] += jnp.dot(x_ref[...], w_ref[...],
                            preferred_element_type=jnp.float32)

    @pl.when(pl.program_id(2) == pl.num_programs(2) - 1)
    def _():
        o_ref[...] = (acc_ref[...] + b_ref[...].astype(jnp.float32)).astype(o_ref.dtype)


def clipvip_attn_kernel(q_ref, k_ref, v_ref, o_ref, *, M, N, L):
    """One grid step: (one batch, one block of Hb heads).

    q_ref/k_ref/v_ref are (T, Hb, hd) views straight out of the fused qkv slab
    (no wrapper transposes); o_ref is the lane-dense (T, Hb*hd) output block.
    The softmax scale is already folded into the Q projection weights.

    cls path: the M proxy queries attend over all T tokens.
    frame path: each frame's L queries attend over [M proxy ++ own L tokens];
    the split [proxy | own] softmax shares max and denominator, so the
    concatenated K/V of the reference is never materialized.  The proxy score
    piece is kept as (Hb, M, N*L): lane-dense minor dim, reduction over M on
    the sublane axis.
    """
    T, Hb, hd = q_ref.shape
    NL = N * L
    f32 = jnp.float32

    # One VMEM re-layout per operand to head-major (XLU has slack here); data
    # stays in the input dtype (bf16) so the MXU runs at native rate.
    q = jnp.transpose(q_ref[...], (1, 0, 2))        # (Hb, T, hd)
    k = jnp.transpose(k_ref[...], (1, 0, 2))
    v = jnp.transpose(v_ref[...], (1, 0, 2))

    k_p = k[:, :M, :]                                # proxy keys / values
    v_p = v[:, :M, :]

    # ---- cls/proxy path: M queries attend over ALL T tokens -------------------
    s_cls = jnp.einsum('hqd,hkd->hqk', q[:, :M, :], k,
                       preferred_element_type=f32)                  # (Hb, M, T)
    m_c = jnp.max(s_cls, axis=-1, keepdims=True)
    e_c = jnp.exp(s_cls - m_c)
    inv_c = pl.reciprocal(jnp.sum(e_c, axis=-1, keepdims=True), approx=True)
    o_cls = jnp.einsum('hqk,hkd->hqd', e_c.astype(v.dtype), v,
                       preferred_element_type=f32) * inv_c          # (Hb, M, hd)

    # ---- frame path: each frame's L queries over [M proxy ++ own L tokens] ----
    q_f = q[:, M:, :]                                                # (Hb, NL, hd)
    k_f = k[:, M:, :]
    v_f = v[:, M:, :]

    # proxy scores with the frame-query axis minor (lane-dense); M on sublanes.
    s_px = jnp.einsum('hmd,hqd->hmq', k_p, q_f,
                      preferred_element_type=f32)                    # (Hb, M, NL)
    # own-frame scores, batched over (head, frame).
    q_fb = q_f.reshape(Hb * N, L, hd)
    k_fb = k_f.reshape(Hb * N, L, hd)
    v_fb = v_f.reshape(Hb * N, L, hd)
    s_own = jnp.einsum('bqd,bkd->bqk', q_fb, k_fb,
                       preferred_element_type=f32)                   # (Hb*N, L, L)
    s_own4 = s_own.reshape(Hb, N, L, L)

    # joint softmax over the split [proxy | own] score pieces (shared max/denom).
    m_f = jnp.maximum(jnp.max(s_px, axis=1),                         # (Hb, NL)
                      jnp.max(s_own4, axis=-1).reshape(Hb, NL))
    e_px = jnp.exp(s_px - m_f[:, None, :])                           # (Hb, M, NL)
    e_own = jnp.exp(s_own4 - m_f.reshape(Hb, N, L)[..., None])       # (Hb, N, L, L)
    denom = jnp.sum(e_px, axis=1) + jnp.sum(e_own, axis=-1).reshape(Hb, NL)
    inv_f = pl.reciprocal(denom, approx=True)                        # (Hb, NL)

    o_px = jnp.einsum('hmq,hmd->hqd', e_px.astype(v.dtype), v_p,
                      preferred_element_type=f32)                    # (Hb, NL, hd)
    o_own = jnp.einsum('bqk,bkd->bqd',
                       e_own.reshape(Hb * N, L, L).astype(v.dtype), v_fb,
                       preferred_element_type=f32).reshape(Hb, NL, hd)
    o_fr = (o_px + o_own) * inv_f[..., None]                         # (Hb, NL, hd)

    # ---- lane-dense stores: (Hb, ., hd) -> (., Hb*hd) in VMEM, then store -----
    o_cls_td = jnp.transpose(o_cls, (1, 0, 2)).reshape(M, Hb * hd)
    o_fr_td = jnp.transpose(o_fr, (1, 0, 2)).reshape(NL, Hb * hd)
    o_ref[:M, :] = o_cls_td.astype(o_ref.dtype)
    o_ref[M:, :] = o_fr_td.astype(o_ref.dtype)


# -------------------------------- wrappers -------------------------------------

def linear_pallas(x, w, b, *, tm=512, tn=512, tk=512):
    """y = x @ w + b.  x: (R, Din), w: (Din, Dout) (pre-transposed at model load),
    b: (Dout,).  Tiled + pipelined with an f32 VMEM accumulator."""
    R, Din = x.shape
    Dout = w.shape[1]

    # dtype-aware sublane alignment for the row tile (8 f32 / 16 bf16 / 32 int8).
    row_align = {4: 8, 2: 16, 1: 32}.get(jnp.dtype(x.dtype).itemsize, 8)
    tm = _pick_tile(R, tm, row_align)
    tn = _pick_tile(Dout, tn, 128)
    tk = _pick_tile(Din, tk, 128)
    Rp, Dinp, Doutp = _round_up(R, tm), _round_up(Din, tk), _round_up(Dout, tn)

    if (Rp, Dinp) != (R, Din):
        x = jnp.pad(x, ((0, Rp - R), (0, Dinp - Din)))
    if (Dinp, Doutp) != (Din, Dout):
        w = jnp.pad(w, ((0, Dinp - Din), (0, Doutp - Dout)))
    if Doutp != Dout:
        b = jnp.pad(b, (0, Doutp - Dout))
    b2 = b.reshape(1, Doutp)

    grid = (Rp // tm, Doutp // tn, Dinp // tk)
    out = pl.pallas_call(
        linear_kernel,
        out_shape=jax.ShapeDtypeStruct((Rp, Doutp), x.dtype),
        grid=grid,
        in_specs=[
            pl.BlockSpec((tm, tk), lambda i, j, kk: (i, kk)),   # activation
            pl.BlockSpec((tk, tn), lambda i, j, kk: (kk, j)),   # weight (Din, Dout)
            pl.BlockSpec((1, tn), lambda i, j, kk: (0, j)),     # bias
        ],
        out_specs=pl.BlockSpec((tm, tn), lambda i, j, kk: (i, j)),
        scratch_shapes=[pltpu.VMEM((tm, tn), jnp.float32)],
        compiler_params=pltpu.CompilerParams(
            dimension_semantics=("parallel", "parallel", "arbitrary"),
            # 512/512/512 bf16 double-buffered + f32 acc is ~4 MB (~8 MB f32):
            # inside every generation's scoped budget, <= half of v7x's 64 MiB.
            vmem_limit_bytes=32 * 1024 * 1024),
    )(x, w, b2)

    if (Rp, Doutp) != (R, Dout):
        out = out[:R, :Dout]
    return out


def clipvip_attention_pallas(qkv5, *, M, N, L, block_h=None):
    """qkv5: (bsz, T, 3, H, hd), a pure reshape view of the fused QKV matmul
    output (never transposed in HBM).  Returns (bsz, T, H*hd) with the embed
    axis ordered [head, head_dim], ready for the output projection."""
    bsz, T, _, H, hd = qkv5.shape
    D = H * hd
    if block_h is None:
        block_h = _pick_head_block(H, hd)

    # TODO(synk): for production CLIP-ViP sizes (L=196, N=12, T~2360) add a
    # frame-chunk grid axis (online softmax across chunks, proxy K/V via a
    # constant index_map) so per-step VMEM stays inside v7x's 64 MiB/TC; at the
    # shapes used here full-T blocks fit comfortably.

    def qkv_spec(plane):
        # pick plane 0/1/2 and the head block straight out of the fused slab;
        # the bsz / plane dims are squeezed, so the kernel sees (T, Hb, hd).
        return pl.BlockSpec(
            (pl.Squeezed(), T, pl.Squeezed(), block_h, hd),
            lambda b, h, p=plane: (b, 0, p, h, 0))

    kern = functools.partial(clipvip_attn_kernel, M=M, N=N, L=L)
    return pl.pallas_call(
        kern,
        out_shape=jax.ShapeDtypeStruct((bsz, T, D), qkv5.dtype),
        grid=(bsz, H // block_h),
        in_specs=[qkv_spec(0), qkv_spec(1), qkv_spec(2)],
        out_specs=pl.BlockSpec((pl.Squeezed(), T, block_h * hd),
                               lambda b, h: (b, 0, h)),
        compiler_params=pltpu.CompilerParams(
            dimension_semantics=("parallel", "parallel"),
            vmem_limit_bytes=32 * 1024 * 1024),
    )(qkv5, qkv5, qkv5)


def prepare_params(params, num_heads):
    """One-time (model-load) parameter prep: fold the softmax scale into the Q
    projection, fuse Q/K/V, and pre-transpose every weight to (Din, Dout) so the
    matmul kernels run a plain A@B on the MXU with no per-tile transpose."""
    embed_dim = params["q_w"].shape[0]
    scale = float(embed_dim // num_heads) ** (-0.5)
    qkv_w = jnp.concatenate(
        [params["q_w"] * scale, params["k_w"], params["v_w"]], axis=0)   # (3D, D)
    qkv_b = jnp.concatenate(
        [params["q_b"] * scale, params["k_b"], params["v_b"]], axis=0)   # (3D,)
    return {
        "qkv_w": jnp.transpose(qkv_w),          # (D, 3D)
        "qkv_b": qkv_b,
        "o_w": jnp.transpose(params["o_w"]),    # (D, D)
        "o_b": params["o_b"],
    }


def clip_attention_forward(hidden_states, inputs_size, fused_params, num_heads):
    """Equivalent of CLIPAttention.forward(hidden_states, inputs_size)[0]."""
    M, N, L = inputs_size
    bsz, T, D = hidden_states.shape
    hd = D // num_heads

    x2d = hidden_states.reshape(bsz * T, D)
    # fused QKV projection; the 5-D view below is a pure reshape (no HBM move).
    qkv = linear_pallas(x2d, fused_params["qkv_w"], fused_params["qkv_b"])  # (bsz*T, 3D)
    qkv5 = qkv.reshape(bsz, T, 3, num_heads, hd)

    attn = clipvip_attention_pallas(qkv5, M=M, N=N, L=L)        # (bsz, T, D)

    out = linear_pallas(attn.reshape(bsz * T, D),
                        fused_params["o_w"], fused_params["o_b"])
    return out.reshape(bsz, T, D)


# ---------------------------- pure-JAX reference --------------------------------

def reference_forward(hidden_states, inputs_size, params, num_heads):
    M, N, L = inputs_size
    bsz, T, D = hidden_states.shape
    hd = D // num_heads
    scale = float(hd) ** (-0.5)

    def lin(x, w, b):
        return x @ w.T + b

    q = lin(hidden_states, params["q_w"], params["q_b"]) * scale
    k = lin(hidden_states, params["k_w"], params["k_b"])
    v = lin(hidden_states, params["v_w"], params["v_b"])

    def shape_(t):
        return t.reshape(bsz, T, num_heads, hd).transpose(0, 2, 1, 3).reshape(
            bsz * num_heads, T, hd)

    qs, ks, vs = shape_(q), shape_(k), shape_(v)

    # frame path
    qf = qs[:, M:].reshape(-1, L, hd)
    kf = jnp.concatenate(
        [jnp.tile(ks[:, :M], (1, N, 1)).reshape(-1, M, hd),
         ks[:, M:].reshape(-1, L, hd)], axis=1)
    vf = jnp.concatenate(
        [jnp.tile(vs[:, :M], (1, N, 1)).reshape(-1, M, hd),
         vs[:, M:].reshape(-1, L, hd)], axis=1)
    wf = jax.nn.softmax(jnp.einsum("bqd,bkd->bqk", qf, kf), axis=-1)
    of = jnp.einsum("bqk,bkd->bqd", wf, vf)
    of = of.reshape(bsz, num_heads, N, L, hd).transpose(0, 2, 3, 1, 4).reshape(
        bsz, N * L, D)

    # cls path
    wc = jax.nn.softmax(jnp.einsum("bqd,bkd->bqk", qs[:, :M], ks), axis=-1)
    oc = jnp.einsum("bqk,bkd->bqd", wc, vs)
    oc = oc.reshape(bsz, num_heads, M, hd).transpose(0, 2, 1, 3).reshape(bsz, M, D)

    out = jnp.concatenate([oc, of], axis=1)
    return lin(out, params["o_w"], params["o_b"])


# -------------------------------------- main ------------------------------------

if __name__ == "__main__":
    # small config: hidden=32, heads=4 (head_dim=8), M=4 proxy tokens,
    # N=2 frames, L=8 tokens per frame, seq = 4 + 2*8 = 20, batch=2.
    embed_dim, num_heads = 32, 4
    M, N, L = 4, 2, 8
    bsz, tgt_len = 2, M + N * L

    key = jax.random.PRNGKey(0)
    keys = jax.random.split(key, 9)
    params = {
        "q_w": 0.05 * jax.random.normal(keys[0], (embed_dim, embed_dim), jnp.float32),
        "q_b": 0.05 * jax.random.normal(keys[1], (embed_dim,), jnp.float32),
        "k_w": 0.05 * jax.random.normal(keys[2], (embed_dim, embed_dim), jnp.float32),
        "k_b": 0.05 * jax.random.normal(keys[3], (embed_dim,), jnp.float32),
        "v_w": 0.05 * jax.random.normal(keys[4], (embed_dim, embed_dim), jnp.float32),
        "v_b": 0.05 * jax.random.normal(keys[5], (embed_dim,), jnp.float32),
        "o_w": 0.05 * jax.random.normal(keys[6], (embed_dim, embed_dim), jnp.float32),
        "o_b": 0.05 * jax.random.normal(keys[7], (embed_dim,), jnp.float32),
    }
    hidden_states = jax.random.normal(keys[8], (bsz, tgt_len, embed_dim), jnp.float32)

    # bf16 activations/weights: native MXU rate on v5e/v6e/v7x.  The reference
    # runs in f32 from the same bf16-rounded values, so only intermediate
    # precision differs -> relaxed tolerance.
    params_bf16 = {k: v.astype(jnp.bfloat16) for k, v in params.items()}
    hidden_bf16 = hidden_states.astype(jnp.bfloat16)

    fused = prepare_params(params_bf16, num_heads)   # one-time "model load" prep
    out = clip_attention_forward(hidden_bf16, (M, N, L), fused, num_heads)
    out = jax.block_until_ready(out)

    ref = reference_forward(hidden_bf16.astype(jnp.float32), (M, N, L),
                            {k: v.astype(jnp.float32) for k, v in params_bf16.items()},
                            num_heads)
    np.testing.assert_allclose(np.asarray(out.astype(jnp.float32)), np.asarray(ref),
                               atol=3e-2, rtol=3e-2)

    print("KERNEL_OK")
</pallas_src>

<mosaic_0001>
module attributes {stable_mosaic.version = 11 : i64} {
  func.func @linear_kernel(%arg0: i32, %arg1: i32, %arg2: i32, %arg3: memref<40x32xbf16, #tpu.memory_space<vmem>>, %arg4: memref<32x96xbf16, #tpu.memory_space<vmem>>, %arg5: memref<1x96xbf16, #tpu.memory_space<vmem>>, %arg6: memref<40x96xbf16, #tpu.memory_space<vmem>>, %arg7: memref<40x96xf32, #tpu.memory_space<vmem>>) attributes {dimension_semantics = [#tpu.dimension_semantics<parallel>, #tpu.dimension_semantics<parallel>, #tpu.dimension_semantics<arbitrary>], iteration_bounds = array<i64: 1, 1, 1>, scalar_prefetch = 0 : i64, scratch_operands = 1 : i64, tpu.core_type = #tpu.core_type<tc>, window_params = [{transform_indices = @transform_0, window_bounds = array<i64: 40, 32>}, {transform_indices = @transform_1, window_bounds = array<i64: 32, 96>}, {transform_indices = @transform_2, window_bounds = array<i64: 1, 96>}, {transform_indices = @transform_3, window_bounds = array<i64: 40, 96>}]} {
    %c0_i32 = arith.constant 0 : i32
    %0 = arith.cmpi eq, %arg2, %c0_i32 : i32
    %1 = arith.extui %0 : i1 to i32
    %c0_i32_0 = arith.constant 0 : i32
    %2 = arith.cmpi ne, %1, %c0_i32_0 : i32
    scf.if %2 {
      %cst_10 = arith.constant 0.000000e+00 : f32
      %12 = vector.broadcast %cst_10 : f32 to vector<40x96xf32>
      %c0_11 = arith.constant 0 : index
      %c0_12 = arith.constant 0 : index
      %13 = vector.load %arg7[%c0_11, %c0_12] : memref<40x96xf32, #tpu.memory_space<vmem>>, vector<40x96xf32>
      tpu.vector_store %arg7[%c0_11, %c0_12], %12 {strides = array<i32>} : memref<40x96xf32, #tpu.memory_space<vmem>>, vector<40x96xf32>,
    } else {
    }
    %c0 = arith.constant 0 : index
    %c0_1 = arith.constant 0 : index
    %3 = vector.load %arg7[%c0, %c0_1] : memref<40x96xf32, #tpu.memory_space<vmem>>, vector<40x96xf32>
    %c0_2 = arith.constant 0 : index
    %c0_3 = arith.constant 0 : index
    %4 = vector.load %arg3[%c0_2, %c0_3] : memref<40x32xbf16, #tpu.memory_space<vmem>>, vector<40x32xbf16>
    %c0_4 = arith.constant 0 : index
    %c0_5 = arith.constant 0 : index
    %5 = vector.load %arg4[%c0_4, %c0_5] : memref<32x96xbf16, #tpu.memory_space<vmem>>, vector<32x96xbf16>
    %cst = arith.constant dense<0.000000e+00> : vector<40x96xf32>
    %6 = tpu.matmul %4, %5, %cst {dimension_numbers = #tpu.dot_dimension_numbers<[1], [0], [0], [1], [0, 0, 1, 1], [], []>} : vector<40x32xbf16>, vector<32x96xbf16>, vector<40x96xf32> -> vector<40x96xf32>
    %7 = arith.addf %3, %6 : vector<40x96xf32>
    %c0_6 = arith.constant 0 : index
    %c0_7 = arith.constant 0 : index
    %8 = vector.load %arg7[%c0_6, %c0_7] : memref<40x96xf32, #tpu.memory_space<vmem>>, vector<40x96xf32>
    tpu.vector_store %arg7[%c0_6, %c0_7], %7 {strides = array<i32>} : memref<40x96xf32, #tpu.memory_space<vmem>>, vector<40x96xf32>,
    %c0_i32_8 = arith.constant 0 : i32
    %9 = arith.cmpi eq, %arg2, %c0_i32_8 : i32
    %10 = arith.extui %9 : i1 to i32
    %c0_i32_9 = arith.constant 0 : i32
    %11 = arith.cmpi ne, %10, %c0_i32_9 : i32
    scf.if %11 {
      %c0_10 = arith.constant 0 : index
      %c0_11 = arith.constant 0 : index
      %12 = vector.load %arg7[%c0_10, %c0_11] : memref<40x96xf32, #tpu.memory_space<vmem>>, vector<40x96xf32>
      %c0_12 = arith.constant 0 : index
      %c0_13 = arith.constant 0 : index
      %13 = vector.load %arg5[%c0_12, %c0_13] : memref<1x96xbf16, #tpu.memory_space<vmem>>, vector<1x96xbf16>
      %14 = arith.extf %13 : vector<1x96xbf16> to vector<1x96xf32>
      %15 = vector.broadcast %14 : vector<1x96xf32> to vector<40x96xf32>
      %16 = arith.addf %12, %15 : vector<40x96xf32>
      %17 = arith.truncf %16 : vector<40x96xf32> to vector<40x96xbf16>
      %c0_14 = arith.constant 0 : index
      %c0_15 = arith.constant 0 : index
      %18 = vector.load %arg6[%c0_14, %c0_15] : memref<40x96xbf16, #tpu.memory_space<vmem>>, vector<40x96xbf16>
      tpu.vector_store %arg6[%c0_14, %c0_15], %17 {strides = array<i32>} : memref<40x96xbf16, #tpu.memory_space<vmem>>, vector<40x96xbf16>,
    } else {
    }
    return
  }
  func.func @transform_0(%arg0: i32, %arg1: i32, %arg2: i32) -> (i32, i32) {
    %c0_i32 = arith.constant 0 : i32
    return %arg0, %arg2 : i32, i32
  }
  func.func @transform_1(%arg0: i32, %arg1: i32, %arg2: i32) -> (i32, i32) {
    %c0_i32 = arith.constant 0 : i32
    return %arg2, %arg1 : i32, i32
  }
  func.func @transform_2(%arg0: i32, %arg1: i32, %arg2: i32) -> (i32, i32) {
    %c0_i32 = arith.constant 0 : i32
    %c0_i32_0 = arith.constant 0 : i32
    return %c0_i32, %arg1 : i32, i32
  }
  func.func @transform_3(%arg0: i32, %arg1: i32, %arg2: i32) -> (i32, i32) {
    %c0_i32 = arith.constant 0 : i32
    return %arg0, %arg1 : i32, i32
  }
}

</mosaic_0001>

<llo_original>
// kernel: tpu_custom_call.1
$region0: #{tpu_custom_call.1}
  #allocation0 [shape = 'u32[]', space=smem, size = 0x4, offset = 0x4, fixed_abs, tag = 'smem constant byte address 0x4 - core index']
  #allocation1 [shape = 'u32[144,128]{1,0:T(1,128)}', space=vmem, size = 0x12000, scoped, tag = 'internal scratch']
  #allocation2 [shape = 'f32[40,96]{1,0:T(8,128)}', space=vmem, size = 0x5000, scoped, tag = 'scratch operand']
  %s0 = inlined_call_operand.vmem [shape: bf16[40,32], index: 0, kind: input, shape index: {}]
  %s1 = inlined_call_operand.vmem [shape: bf16[32,96], index: 1, kind: input, shape index: {}]
  %s2 = inlined_call_operand.vmem [shape: bf16[1,96], index: 2, kind: input, shape index: {}]
  %s3 = inlined_call_operand.hbm [shape: bf16[40,96], index: 3, kind: output, shape index: {}]
  %s4 = sld [smem:[#allocation0]]
  $region30: #{tpu_custom_call.1} parent=0
    _
  %s6 = ssub.s32 1, %s4
  %s7 = scalar_select 0, %s6, %s4
  $region1: #{tpu_custom_call.1} parent=0
    #allocation3 [shape = 'u8[10240]{0}', space=vmem, size = 0x2800, scoped, tag = 'output window, operand 0, single buffered']
    #allocation4 [shape = 's32[1]{0}', space=sflag, size = 0x4, scoped, tag = 'scoped memory for tpu_custom_call.1']
    %8 = vsyncpa [#allocation4], 0
    // Predicated region
    $region2: #{tpu_custom_call.1} parent=1 // pred_check
      _
    $region3: #{tpu_custom_call.1} parent=1 // pred_check_branch
      %10 = sbr.rel (0) target = $region5
    $region4: #{tpu_custom_call.1} parent=1 // pred_region
      _
    $region5: #{tpu_custom_call.1} parent=1 // pred_fallthru
      _
    // Predicated region
    $region6: #{tpu_custom_call.1} parent=1 // pred_check
      _
    $region7: #{tpu_custom_call.1} parent=1 // pred_check_branch
      %12 = sbr.rel (0) target = $region9
    $region8: #{tpu_custom_call.1} parent=1 // pred_region
      _
    $region9: #{tpu_custom_call.1} parent=1 // pred_fallthru
      _
    // Predicated region
    $region10: #{tpu_custom_call.1} parent=1 // pred_check
      _
    $region11: #{tpu_custom_call.1} parent=1 // pred_check_branch
      %14 = sbr.rel (0) target = $region13
    $region12: #{tpu_custom_call.1} parent=1 // pred_region
      _
    $region13: #{tpu_custom_call.1} parent=1 // pred_fallthru
      _
    %p16 = scmp.eq.s32.totalorder 0, 0
    // Predicated region
    $region14: #{tpu_custom_call.1} parent=1 // pred_check
      %p17 = pneg %p16
    $region15: #{tpu_custom_call.1} parent=1 // pred_check_branch
      %19 = sbr.rel (%p17) target = $region17
    $region16: #{tpu_custom_call.1} parent=1 // pred_region
      %vm20 = vcmask 785408
      %21 = vst.msk [vmem:[#allocation2] sm:$0xff] %vm20, 0.0
      %22 = vst.msk [vmem:[#allocation2 + $0x8] sm:$0xff] %vm20, 0.0
      %23 = vst.msk [vmem:[#allocation2 + $0x10] sm:$0xff] %vm20, 0.0
      %24 = vst.msk [vmem:[#allocation2 + $0x18] sm:$0xff] %vm20, 0.0
      %25 = vst.msk [vmem:[#allocation2 + $0x20] sm:$0xff] %vm20, 0.0
    $region17: #{tpu_custom_call.1} parent=1 // pred_fallthru
      _
    %v26 = vld [vmem:[#allocation2] sm:$0xff]
    %v27 = vld [vmem:[#allocation2 + $0x8] sm:$0xff]
    %v28 = vld [vmem:[#allocation2 + $0x10] sm:$0xff]
    %v29 = vld [vmem:[#allocation2 + $0x18] sm:$0xff]
    %v30 = vld [vmem:[#allocation2 + $0x20] sm:$0xff]
    %v31 = vld [vmem:[%s0] sm:$0xf]
    %v32 = vld [vmem:[%s0 + $0x4] sm:$0xf]
    %v33 = vld [vmem:[%s0 + $0x8] sm:$0xf]
    %v34 = vld [vmem:[%s0 + $0xc] sm:$0xf]
    %v35 = vld [vmem:[%s0 + $0x10] sm:$0xf]
    %v36 = vld [vmem:[%s1] sm:$0xf]
    %v37 = vld [vmem:[%s1 + $0x4] sm:$0xf]
    %v38 = vld [vmem:[%s1 + $0x8] sm:$0xf]
    %v39 = vld [vmem:[%s1 + $0xc] sm:$0xf]
    %v45 = vunpack.c.l.b16 %v31
    %v46 = vunpack.c.l.b16 %v32
    %v47 = vunpack.c.l.b16 %v33
    %v48 = vunpack.c.l.b16 %v34
    %v49 = vunpack.c.l.b16 %v35
    %v50 = vpack.c.b16 %v46, %v45
    %v51 = vpack.c.b16 %v48, %v47
    %v52 = vpack.c.b16 %v49, %v49
    %v57 = vunpack.c.l.b16 %v36
    %v58 = vunpack.c.l.b16 %v37
    %v59 = vunpack.c.l.b16 %v38
    %v60 = vunpack.c.l.b16 %v39
    %v61 = vpack.c.b16 %v58, %v57
    %v62 = vpack.c.b16 %v60, %v59
    %vm65 = vcmask 261120
    %v67 = vsel %vm65, %v50, 0
    %v70 = vsel %vm65, %v51, 0
    %v73 = vsel %vm65, %v52, 0
    %75 = vmatprep.subr.bf16.mxu0 0
    %76 = vmatpush1.bf16.msra.mxu0 %v61
    %77 = vmatprep.subr.bf16.mxu0 0
    %78 = vmatpush1.bf16.msra.mxu0 %v62
    %79 = vmatprep.subr.bf16.mxu0 0
    %80 = vmatpush1.bf16.msra.mxu0 0
    %81 = vmatprep.subr.bf16.mxu0 0
    %82 = vmatpush1.bf16.msra.mxu0 0
    %83 = vmatprep.subr.bf16.mxu0 0
    %84 = vmatpush1.bf16.msra.mxu0 0
    %85 = vmatprep.subr.bf16.mxu0 0
    %86 = vmatpush1.bf16.msra.mxu0 0
    %87 = vmatprep.subr.bf16.mxu0 0
    %88 = vmatpush1.bf16.msra.mxu0 0
    %89 = vmatprep.subr.bf16.mxu0 0
    %90 = vmatpush1.bf16.msra.mxu0 0
    %91 = vmatprep.subr.bf16.mxu0 0
    %92 = vmatpush1.bf16.msra.mxu0 0
    %93 = vmatprep.subr.bf16.mxu0 0
    %94 = vmatpush1.bf16.msra.mxu0 0
    %95 = vmatprep.subr.bf16.mxu0 0
    %96 = vmatpush1.bf16.msra.mxu0 0
    %97 = vmatprep.subr.bf16.mxu0 0
    %98 = vmatpush1.bf16.msra.mxu0 0
    %99 = vmatprep.subr.bf16.mxu0 0
    %100 = vmatpush1.bf16.msra.mxu0 0
    %101 = vmatprep.subr.bf16.mxu0 0
    %102 = vmatpush1.bf16.msra.mxu0 0
    %103 = vmatprep.subr.bf16.mxu0 0
    %104 = vmatpush1.bf16.msra.mxu0 0
    %105 = vmatprep.subr.bf16.mxu0 0
    %106 = vmatpush1.bf16.msra.mxu0 0
    %107 = vmatprep.mubr.bf16.mxu0 0
    %108 = vmatmul.mubr.bf16.gmra.mrb[0].mxu0 %v67
    %v109 = vpop.f32.mrb[0].mxu0
    %v110 = vadd.f32 0.0, %v109
    %v111 = vpop.f32.mrb[0].mxu0
    %v112 = vpop.f32.mrb[0].mxu0
    %v113 = vadd.f32 0.0, %v112
    %v114 = vpop.f32.mrb[0].mxu0
    %115 = vmatprep.mubr.bf16.mxu0 0
    %116 = vmatmul.mubr.bf16.gmra.mrb[0].mxu0 %v70
    %v117 = vpop.f32.mrb[0].mxu0
    %v118 = vadd.f32 0.0, %v117
    %v119 = vpop.f32.mrb[0].mxu0
    %v120 = vpop.f32.mrb[0].mxu0
    %v121 = vadd.f32 0.0, %v120
    %v122 = vpop.f32.mrb[0].mxu0
    %123 = vmatprep.mubr.bf16.mxu0 0
    %124 = vmatmul.mubr.bf16.gmra.mrb[0].mxu0 %v73
    %v125 = vpop.f32.mrb[0].mxu0
    %v126 = vadd.f32 0.0, %v125
    %v127 = vpop.f32.mrb[0].mxu0
    %v128 = vpop.f32.mrb[0].mxu0
    %v129 = vpop.f32.mrb[0].mxu0
    %130 = vdwg.mxu0
    %v131 = vadd.f32 %v26, %v110
    %v132 = vadd.f32 %v27, %v113
    %v133 = vadd.f32 %v28, %v118
    %v134 = vadd.f32 %v29, %v121
    %v135 = vadd.f32 %v30, %v126
    %vm136 = vcmask 785408
    %137 = vst.msk [vmem:[#allocation2] sm:$0xff] %vm136, %v131
    %138 = vst.msk [vmem:[#allocation2 + $0x8] sm:$0xff] %vm136, %v132
    %139 = vst.msk [vmem:[#allocation2 + $0x10] sm:$0xff] %vm136, %v133
    %140 = vst.msk [vmem:[#allocation2 + $0x18] sm:$0xff] %vm136, %v134
    %141 = vst.msk [vmem:[#allocation2 + $0x20] sm:$0xff] %vm136, %v135
    // Predicated region
    $region18: #{tpu_custom_call.1} parent=1 // pred_check
      %p142 = pneg %p16
    $region19: #{tpu_custom_call.1} parent=1 // pred_check_branch
      %144 = sbr.rel (%p142) target = $region21
    $region20: #{tpu_custom_call.1} parent=1 // pred_region
      %v145 = vld [vmem:[#allocation2] sm:$0xff]
      %v146 = vld [vmem:[#allocation2 + $0x8] sm:$0xff]
      %v147 = vld [vmem:[#allocation2 + $0x10] sm:$0xff]
      %v148 = vld [vmem:[#allocation2 + $0x18] sm:$0xff]
      %v149 = vld [vmem:[#allocation2 + $0x20] sm:$0xff]
      %v150 = vld [vmem:[%s2] sm:$0x1]
      %v151 = vunpack.c.l.bf16 %v150
      %v152 = vlaneseq
      %v153 = vshrl.u32 %v152, 7
      %v154 = vsub.s32 0, %v153
      %v155 = vrot.slane %v151, %v154
      %v156 = vadd.f32 %v145, %v155
      %v157 = vadd.f32 %v146, %v155
      %v158 = vadd.f32 %v147, %v155
      %v159 = vadd.f32 %v148, %v155
      %v160 = vadd.f32 %v149, %v155
      %v161 = vpack.c.bf16 %v157, %v156
      %v162 = vpack.c.bf16 %v159, %v158
      %v163 = vpack.c.bf16 %v160, %v160
      %v167 = vunpack.c.l.b16 %v161
      %v168 = vunpack.c.h.b16 %v161
      %v169 = vunpack.c.l.b16 %v162
      %v170 = vunpack.c.h.b16 %v162
      %v171 = vunpack.c.l.b16 %v163
      %v172 = vpack.c.b16 %v167, %v167
      %v173 = vpack.c.b16 %v168, %v168
      %v174 = vpack.c.b16 %v169, %v169
      %v175 = vpack.c.b16 %v170, %v170
      %v176 = vpack.c.b16 %v171, %v171
      %vm182 = vcmask 781312
      %183 = vst.msk [vmem:[#allocation3] sm:$0xf] %vm182, %v172
      %184 = vst.msk [vmem:[#allocation3 + $0x4] sm:$0xf] %vm182, %v173
      %185 = vst.msk [vmem:[#allocation3 + $0x8] sm:$0xf] %vm182, %v174
      %186 = vst.msk [vmem:[#allocation3 + $0xc] sm:$0xf] %vm182, %v175
      %187 = vst.msk [vmem:[#allocation3 + $0x10] sm:$0xf] %vm182, %v176
    $region21: #{tpu_custom_call.1} parent=1 // pred_fallthru
      _
    // Predicated region
    $region22: #{tpu_custom_call.1} parent=1 // pred_check
      _
    $region23: #{tpu_custom_call.1} parent=1 // pred_check_branch
      %189 = sbr.rel (0) target = $region25
    $region24: #{tpu_custom_call.1} parent=1 // pred_region
      %s191 = ssub.s32 320, 320
      %192 = vsyncadd [#allocation4], %s191
      %s193 = sshll.u32 [#allocation3], 4
      %s194 = int_to_ptr.vmem [resolvable:$true] %s193
      %199 = dma.vmem_to_hbm [thread:$0]  %s194, 320, %s3, [#allocation4], 64, 64, 4
    $region25: #{tpu_custom_call.1} parent=1 // pred_fallthru
      _
    // Predicated region
    $region26: #{tpu_custom_call.1} parent=1 // pred_check
      _
    $region27: #{tpu_custom_call.1} parent=1 // pred_check_branch
      %201 = sbr.rel (0) target = $region29
    $region28: #{tpu_custom_call.1} parent=1 // pred_region
      %202 = dma.done [#allocation4], 320
    $region29: #{tpu_custom_call.1} parent=1 // pred_fallthru
      _
    %203 = vsyncpa [#allocation4], 1

</llo_original>
